<compile_context>
chip_gen: v7x
topology: tpu7x:2x2x1
jax: 0.10.0
libtpu: 0.0.40
codegen_flags: <defaults>
</compile_context>

<pallas_src>
import functools

import jax
import jax.numpy as jnp
from jax.experimental import pallas as pl
from jax.experimental.pallas import tpu as pltpu

HIDDEN = 128                  # torch Linear hidden width (per head)
FUSED_HIDDEN = 2 * HIDDEN     # policy + critic hidden stacked on the lane axis
OUT_PAD = 128                 # lane-dense packed output width (probs + value + pad)
SUBLANE = 8                   # f32 sublane count; batch rows padded to a multiple


def _net_fused_kernel(x_ref, w1_ref, b1_ref, w2_ref, b2_ref, out_ref, *,
                      num_actions, num_valid_rows):
    """Fused policy+critic forward for ONE rollout step (one grid point).

    x_ref  : (B_pad, D)     current step's (padded) batch of env states
    w1_ref : (D, 256)       = [w1p | w1c]                (VMEM-resident)
    b1_ref : (1, 256)       = [b1p | b1c]                (VMEM-resident)
    w2_ref : (256, 128)     = block_diag(w2p, w2c) pad   (VMEM-resident)
    b2_ref : (1, 128)       = [b2p | b2c | 0...]         (VMEM-resident)
    out_ref: (B_pad, 128)   cols [0:O] = softmax(policy, axis=0), col O = value
    """
    x = x_ref[...]

    # Fused first layer: one (D, 256) matmul + ReLU covers both heads.
    h = jnp.dot(x, w1_ref[...], preferred_element_type=jnp.float32) + b1_ref[...]
    h = jnp.maximum(h, 0.0)

    # Fused second layer: block-diagonal (256, 128) matmul. Columns [0:O] are
    # policy logits, column O is the critic value, remaining columns are zero
    # padding (harmless under the masked column-wise softmax below).
    z = jnp.dot(h, w2_ref[...], preferred_element_type=jnp.float32) + b2_ref[...]

    row = jax.lax.broadcasted_iota(jnp.int32, z.shape, dimension=0)
    col = jax.lax.broadcasted_iota(jnp.int32, z.shape, dimension=1)
    valid = row < num_valid_rows                       # mask padded batch rows

    # Column-wise softmax over axis 0, restricted to the real batch rows
    # (matches F.softmax(policy, 0) on the original 2-D input).
    z_valid = jnp.where(valid, z, -jnp.inf)
    m = jnp.max(z_valid, axis=0, keepdims=True)
    e = jnp.exp(z_valid - m)                           # padded rows -> exp(-inf)=0
    denom = jnp.sum(e, axis=0, keepdims=True)          # >= 1 per column

    # Approx reciprocal on the EUP slot, refined to full f32 accuracy by two
    # Newton steps on the VPU (stays within the 1e-5 reference tolerance).
    r = pl.reciprocal(denom, approx=True)
    r = r * (2.0 - denom * r)
    r = r * (2.0 - denom * r)
    probs = e * r

    # Lane-dense select: softmax for the policy columns, raw value elsewhere.
    out_ref[...] = jnp.where(col < num_actions, probs, z)


@functools.partial(jax.jit, static_argnames=("num_actions",))
def net_forward(x, w1, b1, w2, b2, *, num_actions):
    """Fused A3C forward.

    x: (B, D) for a single forward call, or (T, B, D) for a whole rollout of T
       independent forward calls batched into one pallas_call grid.
    Returns (action_prob, value) with leading dims matching x.
    """
    squeeze_step = x.ndim == 2
    if squeeze_step:
        x = x[None]
    T, B, D = x.shape

    # Pad batch rows up to a sublane multiple so tiles/stores are full (8,128).
    B_pad = pl.cdiv(B, SUBLANE) * SUBLANE
    if B_pad != B:
        x = jnp.pad(x, ((0, 0), (0, B_pad - B), (0, 0)))

    kernel = functools.partial(_net_fused_kernel,
                               num_actions=num_actions, num_valid_rows=B)

    flops = T * (2 * B_pad * D * FUSED_HIDDEN + 2 * B_pad * FUSED_HIDDEN * OUT_PAD)
    bytes_accessed = 4 * (T * B_pad * D                      # activations in
                          + D * FUSED_HIDDEN + FUSED_HIDDEN  # fused layer 1 (once)
                          + FUSED_HIDDEN * OUT_PAD + OUT_PAD # fused layer 2 (once)
                          + T * B_pad * OUT_PAD)             # packed output

    packed = pl.pallas_call(
        kernel,
        out_shape=jax.ShapeDtypeStruct((T, B_pad, OUT_PAD), jnp.float32),
        grid=(T,),
        in_specs=[
            # Per-step activation tile.
            pl.BlockSpec((None, B_pad, D), lambda t: (t, 0, 0)),
            # Weights/biases: constant block index -> DMA'd once, VMEM-resident
            # across all grid steps.
            pl.BlockSpec((D, FUSED_HIDDEN), lambda t: (0, 0)),
            pl.BlockSpec((1, FUSED_HIDDEN), lambda t: (0, 0)),
            pl.BlockSpec((FUSED_HIDDEN, OUT_PAD), lambda t: (0, 0)),
            pl.BlockSpec((1, OUT_PAD), lambda t: (0, 0)),
        ],
        out_specs=pl.BlockSpec((None, B_pad, OUT_PAD), lambda t: (t, 0, 0)),
        compiler_params=pltpu.CompilerParams(
            # Each rollout step is independent (softmax reduction is contained
            # inside one tile), so the grid axis shards across v7x's two TCs.
            dimension_semantics=("parallel",)),
        cost_estimate=pl.CostEstimate(
            flops=flops,
            transcendentals=T * (B_pad * OUT_PAD + OUT_PAD),
            bytes_accessed=bytes_accessed),
    )(x, w1, b1, w2, b2)

    # Slicing stays inside this jit region so it fuses with the custom call.
    action_prob = packed[:, :B, :num_actions]
    value = packed[:, :B, num_actions:num_actions + 1]
    if squeeze_step:
        action_prob, value = action_prob[0], value[0]
    return action_prob, value


def init_params(key, input_size, output_size):
    """Deterministic PyTorch-style (Kaiming-uniform-ish) Linear init, per head."""
    ks = jax.random.split(key, 8)

    def linear(kw, kb, fan_in, fan_out):
        bound = 1.0 / jnp.sqrt(jnp.float32(fan_in))
        w = jax.random.uniform(kw, (fan_in, fan_out), jnp.float32, -bound, bound)
        b = jax.random.uniform(kb, (1, fan_out), jnp.float32, -bound, bound)
        return w, b

    w1p, b1p = linear(ks[0], ks[1], input_size, HIDDEN)
    w2p, b2p = linear(ks[2], ks[3], HIDDEN, output_size)
    w1c, b1c = linear(ks[4], ks[5], input_size, HIDDEN)
    w2c, b2c = linear(ks[6], ks[7], HIDDEN, 1)
    return dict(w1p=w1p, b1p=b1p, w2p=w2p, b2p=b2p,
                w1c=w1c, b1c=b1c, w2c=w2c, b2c=b2c)


def pack_params(params, num_actions):
    """One-time packing: fuse both heads into (D,256) + block-diag (256,128)."""
    O = num_actions
    w1 = jnp.concatenate([params["w1p"], params["w1c"]], axis=1)   # (D, 256)
    b1 = jnp.concatenate([params["b1p"], params["b1c"]], axis=1)   # (1, 256)

    w2 = jnp.zeros((FUSED_HIDDEN, OUT_PAD), jnp.float32)           # (256, 128)
    w2 = w2.at[:HIDDEN, :O].set(params["w2p"])                     # policy block
    w2 = w2.at[HIDDEN:, O:O + 1].set(params["w2c"])                # critic block

    b2 = jnp.zeros((1, OUT_PAD), jnp.float32)                      # (1, 128)
    b2 = b2.at[:, :O].set(params["b2p"])
    b2 = b2.at[:, O:O + 1].set(params["b2c"])
    return w1, b1, w2, b2


def _reference_forward(x, p):
    """Pure-JAX reference mirroring the PyTorch forward (unfused, per-head)."""
    h_p = jnp.maximum(x @ p["w1p"] + p["b1p"], 0.0)
    logits = h_p @ p["w2p"] + p["b2p"]
    prob = jax.nn.softmax(logits, axis=0)
    h_c = jnp.maximum(x @ p["w1c"] + p["b1c"], 0.0)
    val = h_c @ p["w2c"] + p["b2c"]
    return prob, val


if __name__ == "__main__":
    key = jax.random.PRNGKey(0)
    k_param, k_x = jax.random.split(key)

    input_size = 16
    output_size = 4
    batch = 2          # env states per forward call (axis-0 softmax axis)
    steps = 8          # rollout steps batched into one pallas_call grid

    params = init_params(k_param, input_size, output_size)
    w1, b1, w2, b2 = pack_params(params, output_size)

    # Whole rollout in one launch: (T, B, D).
    x_roll = jax.random.normal(k_x, (steps, batch, input_size), jnp.float32)

    action_prob, value = net_forward(x_roll, w1, b1, w2, b2,
                                     num_actions=output_size)
    jax.block_until_ready((action_prob, value))

    ref_prob, ref_val = jax.vmap(lambda xs: _reference_forward(xs, params))(x_roll)
    assert action_prob.shape == (steps, batch, output_size)
    assert value.shape == (steps, batch, 1)
    assert jnp.allclose(action_prob, ref_prob, atol=1e-5, rtol=1e-5)
    assert jnp.allclose(value, ref_val, atol=1e-5, rtol=1e-5)

    # Original single-call 2-D signature (matches torch forward) still works.
    p1, v1 = net_forward(x_roll[0], w1, b1, w2, b2, num_actions=output_size)
    jax.block_until_ready((p1, v1))
    rp1, rv1 = _reference_forward(x_roll[0], params)
    assert p1.shape == (batch, output_size) and v1.shape == (batch, 1)
    assert jnp.allclose(p1, rp1, atol=1e-5, rtol=1e-5)
    assert jnp.allclose(v1, rv1, atol=1e-5, rtol=1e-5)

    print("KERNEL_OK")
</pallas_src>

<mosaic_0001>
module attributes {stable_mosaic.version = 11 : i64} {
  func.func @_net_fused_kernel(%arg0: i32, %arg1: memref<1x8x16xf32, #tpu.memory_space<vmem>>, %arg2: memref<16x256xf32, #tpu.memory_space<vmem>>, %arg3: memref<1x256xf32, #tpu.memory_space<vmem>>, %arg4: memref<256x128xf32, #tpu.memory_space<vmem>>, %arg5: memref<1x128xf32, #tpu.memory_space<vmem>>, %arg6: memref<1x8x128xf32, #tpu.memory_space<vmem>>) attributes {dimension_semantics = [#tpu.dimension_semantics<parallel>], iteration_bounds = array<i64: 8>, scalar_prefetch = 0 : i64, scratch_operands = 0 : i64, tpu.core_type = #tpu.core_type<tc>, window_params = [{transform_indices = @transform_0, window_bounds = array<i64: 1, 8, 16>}, {pipeline_mode = #tpu.pipeline_mode<synchronous>, transform_indices = @transform_1, window_bounds = array<i64: 16, 256>}, {pipeline_mode = #tpu.pipeline_mode<synchronous>, transform_indices = @transform_2, window_bounds = array<i64: 1, 256>}, {pipeline_mode = #tpu.pipeline_mode<synchronous>, transform_indices = @transform_3, window_bounds = array<i64: 256, 128>}, {pipeline_mode = #tpu.pipeline_mode<synchronous>, transform_indices = @transform_4, window_bounds = array<i64: 1, 128>}, {transform_indices = @transform_5, window_bounds = array<i64: 1, 8, 128>}]} {
    %c0 = arith.constant 0 : index
    %c0_0 = arith.constant 0 : index
    %c0_1 = arith.constant 0 : index
    %0 = vector.load %arg1[%c0, %c0_0, %c0_1] : memref<1x8x16xf32, #tpu.memory_space<vmem>>, vector<1x8x16xf32>
    %1 = vector.shape_cast %0 : vector<1x8x16xf32> to vector<8x16xf32>
    %c0_2 = arith.constant 0 : index
    %c0_3 = arith.constant 0 : index
    %2 = vector.load %arg2[%c0_2, %c0_3] : memref<16x256xf32, #tpu.memory_space<vmem>>, vector<16x256xf32>
    %cst = arith.constant dense<0.000000e+00> : vector<8x256xf32>
    %3 = tpu.matmul %1, %2, %cst {dimension_numbers = #tpu.dot_dimension_numbers<[1], [0], [0], [1], [0, 0, 1, 1], [], []>} : vector<8x16xf32>, vector<16x256xf32>, vector<8x256xf32> -> vector<8x256xf32>
    %c0_4 = arith.constant 0 : index
    %c0_5 = arith.constant 0 : index
    %4 = vector.load %arg3[%c0_4, %c0_5] : memref<1x256xf32, #tpu.memory_space<vmem>>, vector<1x256xf32>
    %5 = vector.broadcast %4 : vector<1x256xf32> to vector<8x256xf32>
    %6 = arith.addf %3, %5 : vector<8x256xf32>
    %cst_6 = arith.constant 0.000000e+00 : f32
    %7 = vector.broadcast %cst_6 : f32 to vector<8x256xf32>
    %8 = arith.maximumf %6, %7 : vector<8x256xf32>
    %c0_7 = arith.constant 0 : index
    %c0_8 = arith.constant 0 : index
    %9 = vector.load %arg4[%c0_7, %c0_8] : memref<256x128xf32, #tpu.memory_space<vmem>>, vector<256x128xf32>
    %cst_9 = arith.constant dense<0.000000e+00> : vector<8x128xf32>
    %10 = tpu.matmul %8, %9, %cst_9 {dimension_numbers = #tpu.dot_dimension_numbers<[1], [0], [0], [1], [0, 0, 1, 1], [], []>} : vector<8x256xf32>, vector<256x128xf32>, vector<8x128xf32> -> vector<8x128xf32>
    %c0_10 = arith.constant 0 : index
    %c0_11 = arith.constant 0 : index
    %11 = vector.load %arg5[%c0_10, %c0_11] : memref<1x128xf32, #tpu.memory_space<vmem>>, vector<1x128xf32>
    %12 = vector.broadcast %11 : vector<1x128xf32> to vector<8x128xf32>
    %13 = arith.addf %10, %12 : vector<8x128xf32>
    %14 = tpu.iota {dimensions = array<i32: 0>} : vector<8x128xi32>
    %15 = tpu.iota {dimensions = array<i32: 1>} : vector<8x128xi32>
    %c2_i32 = arith.constant 2 : i32
    %16 = vector.broadcast %c2_i32 : i32 to vector<8x128xi32>
    %17 = arith.cmpi slt, %14, %16 : vector<8x128xi32>
    %cst_12 = arith.constant 0xFF800000 : f32
    %18 = vector.broadcast %cst_12 : f32 to vector<8x128xf32>
    %19 = arith.select %17, %13, %18 : vector<8x128xi1>, vector<8x128xf32>
    %cst_13 = arith.constant dense<0xFF800000> : vector<128xf32>
    %20 = vector.multi_reduction <maximumf>, %19, %cst_13 [0] : vector<8x128xf32> to vector<128xf32>
    %21 = vector.shape_cast %20 : vector<128xf32> to vector<1x128xf32>
    %22 = vector.broadcast %21 : vector<1x128xf32> to vector<8x128xf32>
    %23 = arith.subf %19, %22 : vector<8x128xf32>
    %24 = math.exp %23 : vector<8x128xf32>
    %cst_14 = arith.constant dense<0.000000e+00> : vector<128xf32>
    %25 = vector.multi_reduction <add>, %24, %cst_14 [0] : vector<8x128xf32> to vector<128xf32>
    %26 = vector.shape_cast %25 : vector<128xf32> to vector<1x128xf32>
    %27 = tpu.reciprocal %26 {approx = true} : vector<1x128xf32> -> vector<1x128xf32>
    %28 = arith.mulf %26, %27 : vector<1x128xf32>
    %cst_15 = arith.constant 2.000000e+00 : f32
    %29 = vector.broadcast %cst_15 : f32 to vector<1x128xf32>
    %30 = arith.subf %29, %28 : vector<1x128xf32>
    %31 = arith.mulf %27, %30 : vector<1x128xf32>
    %32 = arith.mulf %26, %31 : vector<1x128xf32>
    %cst_16 = arith.constant 2.000000e+00 : f32
    %33 = vector.broadcast %cst_16 : f32 to vector<1x128xf32>
    %34 = arith.subf %33, %32 : vector<1x128xf32>
    %35 = arith.mulf %31, %34 : vector<1x128xf32>
    %36 = vector.broadcast %35 : vector<1x128xf32> to vector<8x128xf32>
    %37 = arith.mulf %24, %36 : vector<8x128xf32>
    %c4_i32 = arith.constant 4 : i32
    %38 = vector.broadcast %c4_i32 : i32 to vector<8x128xi32>
    %39 = arith.cmpi slt, %15, %38 : vector<8x128xi32>
    %40 = arith.select %39, %37, %13 : vector<8x128xi1>, vector<8x128xf32>
    %c0_17 = arith.constant 0 : index
    %c0_18 = arith.constant 0 : index
    %c0_19 = arith.constant 0 : index
    %41 = vector.load %arg6[%c0_17, %c0_18, %c0_19] : memref<1x8x128xf32, #tpu.memory_space<vmem>>, vector<1x8x128xf32>
    %42 = vector.shape_cast %41 : vector<1x8x128xf32> to vector<8x128xf32>
    %43 = vector.shape_cast %40 : vector<8x128xf32> to vector<1x8x128xf32>
    tpu.vector_store %arg6[%c0_17, %c0_18, %c0_19], %43 {strides = array<i32>} : memref<1x8x128xf32, #tpu.memory_space<vmem>>, vector<1x8x128xf32>,
    return
  }
  func.func @transform_0(%arg0: i32) -> (i32, i32, i32) {
    %c0_i32 = arith.constant 0 : i32
    %c0_i32_0 = arith.constant 0 : i32
    %c0_i32_1 = arith.constant 0 : i32
    return %arg0, %c0_i32, %c0_i32_0 : i32, i32, i32
  }
  func.func @transform_1(%arg0: i32) -> (i32, i32) {
    %c0_i32 = arith.constant 0 : i32
    %c0_i32_0 = arith.constant 0 : i32
    %c0_i32_1 = arith.constant 0 : i32
    return %c0_i32, %c0_i32_0 : i32, i32
  }
  func.func @transform_2(%arg0: i32) -> (i32, i32) {
    %c0_i32 = arith.constant 0 : i32
    %c0_i32_0 = arith.constant 0 : i32
    %c0_i32_1 = arith.constant 0 : i32
    return %c0_i32, %c0_i32_0 : i32, i32
  }
  func.func @transform_3(%arg0: i32) -> (i32, i32) {
    %c0_i32 = arith.constant 0 : i32
    %c0_i32_0 = arith.constant 0 : i32
    %c0_i32_1 = arith.constant 0 : i32
    return %c0_i32, %c0_i32_0 : i32, i32
  }
  func.func @transform_4(%arg0: i32) -> (i32, i32) {
    %c0_i32 = arith.constant 0 : i32
    %c0_i32_0 = arith.constant 0 : i32
    %c0_i32_1 = arith.constant 0 : i32
    return %c0_i32, %c0_i32_0 : i32, i32
  }
  func.func @transform_5(%arg0: i32) -> (i32, i32, i32) {
    %c0_i32 = arith.constant 0 : i32
    %c0_i32_0 = arith.constant 0 : i32
    %c0_i32_1 = arith.constant 0 : i32
    return %arg0, %c0_i32, %c0_i32_0 : i32, i32, i32
  }
}

</mosaic_0001>

<llo_original>
// kernel: net_forward.1
$region0: #{net_forward.1}
  #allocation0 [shape = 'u32[]', space=smem, size = 0x4, offset = 0x4, fixed_abs, tag = 'smem constant byte address 0x4 - core index']
  #allocation1 [shape = 'u32[144,128]{1,0:T(1,128)}', space=vmem, size = 0x12000, scoped, tag = 'internal scratch']
  %s0 = inlined_call_operand.vmem [shape: f32[8,8,16], index: 0, kind: input, shape index: {}]
  %s1 = inlined_call_operand.vmem [shape: f32[16,256], index: 1, kind: input, shape index: {}]
  %s2 = inlined_call_operand.vmem [shape: f32[1,256], index: 2, kind: input, shape index: {}]
  %s3 = inlined_call_operand.hbm [shape: f32[256,128], index: 3, kind: input, shape index: {}]
  %s4 = inlined_call_operand.vmem [shape: f32[1,128], index: 4, kind: input, shape index: {}]
  %s5 = inlined_call_operand.vmem [shape: f32[8,8,128], index: 5, kind: output, shape index: {}]
  %s6 = sld [smem:[#allocation0]]
  $region57: #{net_forward.1} parent=0
    _
  %s8 = ssub.s32 1, %s6
  %s9 = scalar_select 0, %s8, %s6
  $region1: #{net_forward.1} parent=0
    #allocation2 [shape = 'u8[131072]{0}', space=vmem, size = 0x20000, scoped, tag = 'input window, operand 3, single buffered']
    #allocation3 [shape = 's32[2]{0}', space=sflag, size = 0x8, scoped, tag = 'scoped memory for net_forward.1']
    %10 = vsyncpa [#allocation3], 0
    loop: start=0, step=1, limit=10
    $region2: #{net_forward.1} parent=1 // loop_pre_header
      _
    $region3: #{net_forward.1} parent=1 // loop_header
      %s12 = sphi 0, %s16
      %p13 = scmp.ge.s32.totalorder %s12, 10
      %s22 = sphi 0, %s24
      %s25 = sphi 0, %s22
      %s26 = sphi 0, %s25
      %s42 = sphi 0, %s26
      %s46 = sphi 0, %s46
      %s48 = sphi 0, %s46
      %s49 = sphi 0, %s48
      %s63 = sphi 0, %s49
      %s67 = sphi 0, %s67
      %s69 = sphi 0, %s67
      %s70 = sphi 0, %s69
      %s84 = sphi 0, %s70
      %s88 = sphi 0, %s88
      %s90 = sphi 0, %s88
      %s91 = sphi 0, %s90
      %s105 = sphi 0, %s91
      %s109 = sphi 0, %s109
      %s111 = sphi 0, %s109
      %s112 = sphi 0, %s111
      %s126 = sphi 0, %s112
      %s132 = sphi 0, %s134
      %s135 = sphi 0, %s132
      %s136 = sphi 0, %s135
      %s152 = sphi 0, %s136
    $region4: #{net_forward.1} parent=1 // loop_header_branch
      %15 = sbr.rel (%p13) target = $region8
    $region5: #{net_forward.1} parent=1 // loop_body
      %s17 = ssub.s32 %s12, 1
      %s18 = ssub.s32 %s12, 2
      %s19 = sadd.s32 %s12, 1
      %s20 = ssub.s32 %s12, %s19
      %p21 = scmp.eq.s32.totalorder %s20, 0
      %s23 = sadd.s32 %s22, 1
      %s24 = scalar_select %p21, %s22, %s23
      %p27 = pneg %p21
      %p28 = scmp.eq.s32.totalorder %s12, 7
      %p29 = por %p27, %p28
      %p30 = scmp.ne.s32.totalorder %s22, %s25
      %p31 = scmp.eq.s32.totalorder %s12, 0
      %p32 = por %p30, %p31
      %p33 = scmp.ne.s32.totalorder %s22, %s25
      %p34 = scmp.eq.s32.totalorder %s17, 7
      %p35 = por %p33, %p34
      %p36 = scmp.ne.s32.totalorder %s25, %s26
      %p37 = scmp.eq.s32.totalorder %s17, 0
      %p38 = por %p36, %p37
      %p39 = scmp.ne.s32.totalorder %s25, %s26
      %p40 = scmp.eq.s32.totalorder %s18, 7
      %p41 = por %p39, %p40
      %p43 = scmp.ne.s32.totalorder %s26, %s42
      %p44 = scmp.eq.s32.totalorder %s18, 0
      %p45 = por %p43, %p44
      %s47 = sadd.s32 %s46, 1
      %p50 = scmp.eq.s32.totalorder %s12, 7
      %p51 = scmp.ne.s32.totalorder %s46, %s48
      %p52 = scmp.eq.s32.totalorder %s12, 0
      %p53 = por %p51, %p52
      %p54 = scmp.ne.s32.totalorder %s46, %s48
      %p55 = scmp.eq.s32.totalorder %s17, 7
      %p56 = por %p54, %p55
      %p57 = scmp.ne.s32.totalorder %s48, %s49
      %p58 = scmp.eq.s32.totalorder %s17, 0
      %p59 = por %p57, %p58
      %p60 = scmp.ne.s32.totalorder %s48, %s49
      %p61 = scmp.eq.s32.totalorder %s18, 7
      %p62 = por %p60, %p61
      %p64 = scmp.ne.s32.totalorder %s49, %s63
      %p65 = scmp.eq.s32.totalorder %s18, 0
      %p66 = por %p64, %p65
      %s68 = sadd.s32 %s67, 1
      %p71 = scmp.eq.s32.totalorder %s12, 7
      %p72 = scmp.ne.s32.totalorder %s67, %s69
      %p73 = scmp.eq.s32.totalorder %s12, 0
      %p74 = por %p72, %p73
      %p75 = scmp.ne.s32.totalorder %s67, %s69
      %p76 = scmp.eq.s32.totalorder %s17, 7
      %p77 = por %p75, %p76
      %p78 = scmp.ne.s32.totalorder %s69, %s70
      %p79 = scmp.eq.s32.totalorder %s17, 0
      %p80 = por %p78, %p79
      %p81 = scmp.ne.s32.totalorder %s69, %s70
      %p82 = scmp.eq.s32.totalorder %s18, 7
      %p83 = por %p81, %p82
      %p85 = scmp.ne.s32.totalorder %s70, %s84
      %p86 = scmp.eq.s32.totalorder %s18, 0
      %p87 = por %p85, %p86
      %s89 = sadd.s32 %s88, 1
      %p92 = scmp.eq.s32.totalorder %s12, 7
      %p93 = scmp.ne.s32.totalorder %s88, %s90
      %p94 = scmp.eq.s32.totalorder %s12, 0
      %p95 = por %p93, %p94
      %p96 = scmp.ne.s32.totalorder %s88, %s90
      %p97 = scmp.eq.s32.totalorder %s17, 7
      %p98 = por %p96, %p97
      %p99 = scmp.ne.s32.totalorder %s90, %s91
      %p100 = scmp.eq.s32.totalorder %s17, 0
      %p101 = por %p99, %p100
      %p102 = scmp.ne.s32.totalorder %s90, %s91
      %p103 = scmp.eq.s32.totalorder %s18, 7
      %p104 = por %p102, %p103
      %p106 = scmp.ne.s32.totalorder %s91, %s105
      %p107 = scmp.eq.s32.totalorder %s18, 0
      %p108 = por %p106, %p107
      %s110 = sadd.s32 %s109, 1
      %p113 = scmp.eq.s32.totalorder %s12, 7
      %p114 = scmp.ne.s32.totalorder %s109, %s111
      %p115 = scmp.eq.s32.totalorder %s12, 0
      %p116 = por %p114, %p115
      %p117 = scmp.ne.s32.totalorder %s109, %s111
      %p118 = scmp.eq.s32.totalorder %s17, 7
      %p119 = por %p117, %p118
      %p120 = scmp.ne.s32.totalorder %s111, %s112
      %p121 = scmp.eq.s32.totalorder %s17, 0
      %p122 = por %p120, %p121
      %p123 = scmp.ne.s32.totalorder %s111, %s112
      %p124 = scmp.eq.s32.totalorder %s18, 7
      %p125 = por %p123, %p124
      %p127 = scmp.ne.s32.totalorder %s112, %s126
      %p128 = scmp.eq.s32.totalorder %s18, 0
      %p129 = por %p127, %p128
      %s130 = ssub.s32 %s12, %s19
      %p131 = scmp.eq.s32.totalorder %s130, 0
      %s133 = sadd.s32 %s132, 1
      %s134 = scalar_select %p131, %s132, %s133
      %p137 = pneg %p131
      %p138 = scmp.eq.s32.totalorder %s12, 7
      %p139 = por %p137, %p138
      %p140 = scmp.ne.s32.totalorder %s132, %s135
      %p141 = scmp.eq.s32.totalorder %s12, 0
      %p142 = por %p140, %p141
      %p143 = scmp.ne.s32.totalorder %s132, %s135
      %p144 = scmp.eq.s32.totalorder %s17, 7
      %p145 = por %p143, %p144
      %p146 = scmp.ne.s32.totalorder %s135, %s136
      %p147 = scmp.eq.s32.totalorder %s17, 0
      %p148 = por %p146, %p147
      %p149 = scmp.ne.s32.totalorder %s135, %s136
      %p150 = scmp.eq.s32.totalorder %s18, 7
      %p151 = por %p149, %p150
      %p153 = scmp.ne.s32.totalorder %s136, %s152
      %p154 = scmp.eq.s32.totalorder %s18, 0
      %p155 = por %p153, %p154
      %p156 = scmp.le.s32.totalorder 1, %s12
      %p157 = scmp.lt.s32.totalorder %s12, 9
      %p158 = pnand %p156, %p157
      %p159 = pneg %p158
      // Predicated region
      $region9: #{net_forward.1} parent=5 // pred_check
        _
      $region10: #{net_forward.1} parent=5 // pred_check_branch
        %161 = sbr.rel (%p158) target = $region12
      $region11: #{net_forward.1} parent=5 // pred_region
        %s162 = ssub.s32 %s12, 1
        // Predicated region
        $region13: #{net_forward.1} parent=11 // pred_check
          %p163 = pneg %p59
        $region14: #{net_forward.1} parent=11 // pred_check_branch
          %165 = sbr.rel (%p163) target = $region16
        $region15: #{net_forward.1} parent=11 // pred_region
          _
        $region16: #{net_forward.1} parent=11 // pred_fallthru
          _
        // Predicated region
        $region17: #{net_forward.1} parent=11 // pred_check
          %p166 = pneg %p80
        $region18: #{net_forward.1} parent=11 // pred_check_branch
          %168 = sbr.rel (%p166) target = $region20
        $region19: #{net_forward.1} parent=11 // pred_region
          _
        $region20: #{net_forward.1} parent=11 // pred_fallthru
          _
        // Predicated region
        $region21: #{net_forward.1} parent=11 // pred_check
          %p169 = pneg %p101
        $region22: #{net_forward.1} parent=11 // pred_check_branch
          %171 = sbr.rel (%p169) target = $region24
        $region23: #{net_forward.1} parent=11 // pred_region
          %s173 = ssub.s32 4096, 4096
          %174 = vsyncadd [#allocation3], %s173
          %s175 = sshll.u32 [#allocation2], 4
          %s176 = int_to_ptr.vmem [resolvable:$true] %s175
          %181 = dma.hbm_to_vmem [thread:$0]  %s3, 4096, %s176, [#allocation3], 128, 128, 8
        $region24: #{net_forward.1} parent=11 // pred_fallthru
          _
        // Predicated region
        $region25: #{net_forward.1} parent=11 // pred_check
          %p182 = pneg %p122
        $region26: #{net_forward.1} parent=11 // pred_check_branch
          %184 = sbr.rel (%p182) target = $region28
        $region27: #{net_forward.1} parent=11 // pred_region
          _
        $region28: #{net_forward.1} parent=11 // pred_fallthru
          _
      $region12: #{net_forward.1} parent=5 // pred_fallthru
        _
      %p185 = scmp.lt.s32.totalorder %s12, 8
      // Predicated region
      $region29: #{net_forward.1} parent=5 // pred_check
        %p186 = pneg %p185
      $region30: #{net_forward.1} parent=5 // pred_check_branch
        %188 = sbr.rel (%p186) target = $region32
      $region31: #{net_forward.1} parent=5 // pred_region
        // Predicated region
        $region33: #{net_forward.1} parent=31 // pred_check
          %p189 = pneg %p32
        $region34: #{net_forward.1} parent=31 // pred_check_branch
          %191 = sbr.rel (%p189) target = $region36
        $region35: #{net_forward.1} parent=31 // pred_region
          %p192 = scmp.lt.s32.totalorder %s12, 7
          %s193 = scalar_select %p192, %s12, 7
          %s194 = smul.addr %s193, 8
          %s195 = scalar_lea.vmem %s0, %s194
        $region36: #{net_forward.1} parent=31 // pred_fallthru
          _
      $region32: #{net_forward.1} parent=5 // pred_fallthru
        _
      %p196 = scmp.le.s32.totalorder 1, %s12
      %p197 = scmp.lt.s32.totalorder %s12, 9
      %p198 = pnand %p196, %p197
      %p199 = pneg %p198
      // Predicated region
      $region37: #{net_forward.1} parent=5 // pred_check
        _
      $region38: #{net_forward.1} parent=5 // pred_check_branch
        %201 = sbr.rel (%p198) target = $region40
      $region39: #{net_forward.1} parent=5 // pred_region
        %s202 = ssub.s32 %s12, 1
        // Predicated region
        $region41: #{net_forward.1} parent=39 // pred_check
          %p203 = pneg %p101
        $region42: #{net_forward.1} parent=39 // pred_check_branch
          %205 = sbr.rel (%p203) target = $region44
        $region43: #{net_forward.1} parent=39 // pred_region
          %206 = dma.done [#allocation3], 4096
        $region44: #{net_forward.1} parent=39 // pred_fallthru
          _
        %p207 = scmp.lt.s32.totalorder %s17, 7
        %s208 = scalar_select %p207, %s17, 7
        %s209 = smul.addr %s208, 8
        %s210 = scalar_lea.vmem %s0, %s209
        %p211 = pneg %p38
        %p212 = pneg %p35
        %p213 = pneg %p59
        %p214 = pneg %p56
        %p215 = pneg %p80
        %p216 = pneg %p77
        %p217 = pneg %p101
        %p218 = pneg %p98
        %p219 = pneg %p122
        %p220 = pneg %p119
        %p221 = pneg %p148
        %p222 = pneg %p145
        %p223 = scmp.lt.s32.totalorder %s17, 7
        %s224 = scalar_select %p223, %s17, 7
        %s225 = smul.addr %s224, 8
        %s226 = scalar_lea.vmem %s5, %s225
        %p227 = scmp.lt.s32.totalorder %s17, 7
        %s228 = scalar_select %p227, %s17, 7
        %s229 = smul.addr %s228, 8
        %s230 = scalar_lea.vmem %s0, %s229
        %p231 = scmp.lt.s32.totalorder %s17, 7
        %s232 = scalar_select %p231, %s17, 7
        %s233 = smul.addr %s232, 8
        %s234 = scalar_lea.vmem %s5, %s233
        %v235 = vld [vmem:[%s230] sm:$0xff]
        %v236 = vld [vmem:[%s1] sm:$0xff]
        %v237 = vld [vmem:[%s1 + $0x8] sm:$0xff]
        %v238 = vld [vmem:[%s1 + $0x10] sm:$0xff]
        %v239 = vld [vmem:[%s1 + $0x18] sm:$0xff]
        %v240 = vld [vmem:[%s2] sm:$0x3]
        %v242 = vlaneseq
        %v243 = vshrl.u32 %v242, 7
        %v244 = vsub.s32 0, %v243
        %v245 = vrot.slane %v240, %v244
        %v246 = vlaneseq
        %v247 = vshrl.u32 %v246, 7
        %v248 = vsub.s32 1, %v247
        %v249 = vrot.slane %v240, %v248
        %vm252 = vcmask 130048
        %v254 = vsel %vm252, %v235, 0
        %256 = vmatprep.subr.mxu0 %v237
        %257 = vmatpush1.msra.mxu0 %v236
        %258 = vmatprep.subr.mxu0 %v239
        %259 = vmatpush1.msra.mxu0 %v238
        %260 = vmatprep.subr.mxu0 0.0
        %261 = vmatpush1.msra.mxu0 0.0
        %262 = vmatprep.subr.mxu0 0.0
        %263 = vmatpush1.msra.mxu0 0.0
        %264 = vmatprep.subr.mxu0 0.0
        %265 = vmatpush1.msra.mxu0 0.0
        %266 = vmatprep.subr.mxu0 0.0
        %267 = vmatpush1.msra.mxu0 0.0
        %268 = vmatprep.subr.mxu0 0.0
        %269 = vmatpush1.msra.mxu0 0.0
        %270 = vmatprep.subr.mxu0 0.0
        %271 = vmatpush1.msra.mxu0 0.0
        %272 = vmatprep.subr.mxu0 0.0
        %273 = vmatpush1.msra.mxu0 0.0
        %274 = vmatprep.subr.mxu0 0.0
        %275 = vmatpush1.msra.mxu0 0.0
        %276 = vmatprep.subr.mxu0 0.0
        %277 = vmatpush1.msra.mxu0 0.0
        %278 = vmatprep.subr.mxu0 0.0
        %279 = vmatpush1.msra.mxu0 0.0
        %280 = vmatprep.subr.mxu0 0.0
        %281 = vmatpush1.msra.mxu0 0.0
        %282 = vmatprep.subr.mxu0 0.0
        %283 = vmatpush1.msra.mxu0 0.0
        %284 = vmatprep.subr.mxu0 0.0
        %285 = vmatpush1.msra.mxu0 0.0
        %286 = vmatprep.subr.mxu0 0.0
        %287 = vmatpush1.msra.mxu0 0.0
        %288 = vmatprep.subr.mxu0 0.0
        %289 = vmatpush1.msra.mxu0 0.0
        %290 = vmatprep.subr.mxu0 0.0
        %291 = vmatpush1.msra.mxu0 0.0
        %292 = vmatprep.subr.mxu0 0.0
        %293 = vmatpush1.msra.mxu0 0.0
        %294 = vmatprep.subr.mxu0 0.0
        %295 = vmatpush1.msra.mxu0 0.0
        %296 = vmatprep.subr.mxu0 0.0
        %297 = vmatpush1.msra.mxu0 0.0
        %298 = vmatprep.subr.mxu0 0.0
        %299 = vmatpush1.msra.mxu0 0.0
        %300 = vmatprep.subr.mxu0 0.0
        %301 = vmatpush1.msra.mxu0 0.0
        %302 = vmatprep.subr.mxu0 0.0
        %303 = vmatpush1.msra.mxu0 0.0
        %304 = vmatprep.subr.mxu0 0.0
        %305 = vmatpush1.msra.mxu0 0.0
        %306 = vmatprep.subr.mxu0 0.0
        %307 = vmatpush1.msra.mxu0 0.0
        %308 = vmatprep.subr.mxu0 0.0
        %309 = vmatpush1.msra.mxu0 0.0
        %310 = vmatprep.subr.mxu0 0.0
        %311 = vmatpush1.msra.mxu0 0.0
        %312 = vmatprep.subr.mxu0 0.0
        %313 = vmatpush1.msra.mxu0 0.0
        %314 = vmatprep.subr.mxu0 0.0
        %315 = vmatpush1.msra.mxu0 0.0
        %316 = vmatprep.subr.mxu0 0.0
        %317 = vmatpush1.msra.mxu0 0.0
        %318 = vmatprep.subr.mxu0 0.0
        %319 = vmatpush1.msra.mxu0 0.0
        %320 = vmatprep.mubr.f32.mxu0 0.0
        %321 = vmatmul.mubr.f32.gmra.mrb[0].mxu0 %v254
        %v322 = vpop.f32.mrb[0].mxu0
        %v323 = vadd.f32 %v245, %v322
        %v324 = vpop.f32.mrb[0].mxu0
        %v325 = vadd.f32 %v249, %v324
        %326 = vdwg.mxu0
        %v327 = vmax.f32 %v323, 0.0
        %v328 = vmax.f32 %v325, 0.0
        %v329 = vld [vmem:[#allocation2] sm:$0xff]
        %v330 = vld [vmem:[#allocation2 + $0x8] sm:$0xff]
        %v331 = vld [vmem:[#allocation2 + $0x10] sm:$0xff]
        %v332 = vld [vmem:[#allocation2 + $0x18] sm:$0xff]
        %v333 = vld [vmem:[#allocation2 + $0x20] sm:$0xff]
        %v334 = vld [vmem:[#allocation2 + $0x28] sm:$0xff]
        %v335 = vld [vmem:[#allocation2 + $0x30] sm:$0xff]
        %v336 = vld [vmem:[#allocation2 + $0x38] sm:$0xff]
        %v337 = vld [vmem:[#allocation2 + $0x40] sm:$0xff]
        %v338 = vld [vmem:[#allocation2 + $0x48] sm:$0xff]
        %v339 = vld [vmem:[#allocation2 + $0x50] sm:$0xff]
        %v340 = vld [vmem:[#allocation2 + $0x58] sm:$0xff]
        %v341 = vld [vmem:[#allocation2 + $0x60] sm:$0xff]
        %v342 = vld [vmem:[#allocation2 + $0x68] sm:$0xff]
        %v343 = vld [vmem:[#allocation2 + $0x70] sm:$0xff]
        %v344 = vld [vmem:[#allocation2 + $0x78] sm:$0xff]
        %v345 = vld [vmem:[#allocation2 + $0x80] sm:$0xff]
        %v346 = vld [vmem:[#allocation2 + $0x88] sm:$0xff]
        %v347 = vld [vmem:[#allocation2 + $0x90] sm:$0xff]
        %v348 = vld [vmem:[#allocation2 + $0x98] sm:$0xff]
        %v349 = vld [vmem:[#allocation2 + $0xa0] sm:$0xff]
        %v350 = vld [vmem:[#allocation2 + $0xa8] sm:$0xff]
        %v351 = vld [vmem:[#allocation2 + $0xb0] sm:$0xff]
        %v352 = vld [vmem:[#allocation2 + $0xb8] sm:$0xff]
        %v353 = vld [vmem:[#allocation2 + $0xc0] sm:$0xff]
        %v354 = vld [vmem:[#allocation2 + $0xc8] sm:$0xff]
        %v355 = vld [vmem:[#allocation2 + $0xd0] sm:$0xff]
        %v356 = vld [vmem:[#allocation2 + $0xd8] sm:$0xff]
        %v357 = vld [vmem:[#allocation2 + $0xe0] sm:$0xff]
        %v358 = vld [vmem:[#allocation2 + $0xe8] sm:$0xff]
        %v359 = vld [vmem:[#allocation2 + $0xf0] sm:$0xff]
        %v360 = vld [vmem:[#allocation2 + $0xf8] sm:$0xff]
        %v361 = vld [vmem:[%s4] sm:$0x1]
        %v363 = vlaneseq
        %v364 = vshrl.u32 %v363, 7
        %v365 = vsub.s32 0, %v364
        %v366 = vrot.slane %v361, %v365
        %368 = vmatprep.subr.mxu0 0.0
        %369 = vmatpush1.msra.mxu0 %v329
        %370 = vmatprep.subr.mxu0 0.0
        %371 = vmatpush1.msra.mxu0 %v330
        %372 = vmatprep.subr.mxu0 0.0
        %373 = vmatpush1.msra.mxu0 %v331
        %374 = vmatprep.subr.mxu0 0.0
        %375 = vmatpush1.msra.mxu0 %v332
        %376 = vmatprep.subr.mxu0 0.0
        %377 = vmatpush1.msra.mxu0 %v333
        %378 = vmatprep.subr.mxu0 0.0
        %379 = vmatpush1.msra.mxu0 %v334
        %380 = vmatprep.subr.mxu0 0.0
        %381 = vmatpush1.msra.mxu0 %v335
        %382 = vmatprep.subr.mxu0 0.0
        %383 = vmatpush1.msra.mxu0 %v336
        %384 = vmatprep.subr.mxu0 0.0
        %385 = vmatpush1.msra.mxu0 %v337
        %386 = vmatprep.subr.mxu0 0.0
        %387 = vmatpush1.msra.mxu0 %v338
        %388 = vmatprep.subr.mxu0 0.0
        %389 = vmatpush1.msra.mxu0 %v339
        %390 = vmatprep.subr.mxu0 0.0
        %391 = vmatpush1.msra.mxu0 %v340
        %392 = vmatprep.subr.mxu0 0.0
        %393 = vmatpush1.msra.mxu0 %v341
        %394 = vmatprep.subr.mxu0 0.0
        %395 = vmatpush1.msra.mxu0 %v342
        %396 = vmatprep.subr.mxu0 0.0
        %397 = vmatpush1.msra.mxu0 %v343
        %398 = vmatprep.subr.mxu0 0.0
        %399 = vmatpush1.msra.mxu0 %v344
        %400 = vmatprep.subr.mxu0 0.0
        %401 = vmatpush1.msra.mxu0 %v345
        %402 = vmatprep.subr.mxu0 0.0
        %403 = vmatpush1.msra.mxu0 %v346
        %404 = vmatprep.subr.mxu0 0.0
        %405 = vmatpush1.msra.mxu0 %v347
        %406 = vmatprep.subr.mxu0 0.0
        %407 = vmatpush1.msra.mxu0 %v348
        %408 = vmatprep.subr.mxu0 0.0
        %409 = vmatpush1.msra.mxu0 %v349
        %410 = vmatprep.subr.mxu0 0.0
        %411 = vmatpush1.msra.mxu0 %v350
        %412 = vmatprep.subr.mxu0 0.0
        %413 = vmatpush1.msra.mxu0 %v351
        %414 = vmatprep.subr.mxu0 0.0
        %415 = vmatpush1.msra.mxu0 %v352
        %416 = vmatprep.subr.mxu0 0.0
        %417 = vmatpush1.msra.mxu0 %v353
        %418 = vmatprep.subr.mxu0 0.0
        %419 = vmatpush1.msra.mxu0 %v354
        %420 = vmatprep.subr.mxu0 0.0
        %421 = vmatpush1.msra.mxu0 %v355
        %422 = vmatprep.subr.mxu0 0.0
        %423 = vmatpush1.msra.mxu0 %v356
        %424 = vmatprep.subr.mxu0 0.0
        %425 = vmatpush1.msra.mxu0 %v357
        %426 = vmatprep.subr.mxu0 0.0
        %427 = vmatpush1.msra.mxu0 %v358
        %428 = vmatprep.subr.mxu0 0.0
        %429 = vmatpush1.msra.mxu0 %v359
        %430 = vmatprep.subr.mxu0 0.0
        %431 = vmatpush1.msra.mxu0 %v360
        %432 = vmatprep.mubr.f32.mxu0 %v328
        %433 = vmatmul.mubr.f32.gmra.mrb[0].mxu0 %v327
        %v434 = vpop.f32.mrb[0].mxu0
        %v435 = vadd.f32 %v366, %v434
        %v436 = vpop.f32.mrb[0].mxu0
        %437 = vdwg.mxu0
        %v438 = vlaneseq
        %v439 = vshrl.u32 %v438, 7
        %v440 = vlaneseq
        %v441 = vand.u32 %v440, 127
        %vm442 = vcmp.lt.s32.totalorder %v439, 2
        %v443 = vsel %vm442, %v435, -inf
        %v444 = vrot.slane %v443, 4
        %v445 = vmax.f32 %v443, %v444
        %v446 = vrot.slane %v445, 2
        %v447 = vmax.f32 %v445, %v446
        %v448 = vrot.slane %v447, 1
        %v449 = vmax.f32 %v447, %v448
        %v450 = vsub.f32 %v443, %v449
        %v451 = vmul.f32 %v450, 1.442695
        %v452 = vpow.pop %v451
        %v453 = vrot.slane %v452, 4
        %v454 = vadd.f32 %v452, %v453
        %v455 = vrot.slane %v454, 2
        %v456 = vadd.f32 %v454, %v455
        %v457 = vrot.slane %v456, 1
        %v458 = vadd.f32 %v456, %v457
        %v459 = vrcp.pop %v458
        %v460 = vmul.f32 %v458, %v459
        %v461 = vsub.f32 2.0, %v460
        %v462 = vmul.f32 %v459, %v461
        %v463 = vmul.f32 %v458, %v462
        %v464 = vsub.f32 2.0, %v463
        %v465 = vmul.f32 %v462, %v464
        %v466 = vmul.f32 %v452, %v465
        %vm467 = vcmp.lt.s32.totalorder %v441, 4
        %v468 = vsel %vm467, %v466, %v435
        %469 = vst [vmem:[%s234] sm:$0xff] %v468
        %p470 = scmp.lt.s32.totalorder %s17, 7
        %s471 = scalar_select %p470, %s17, 7
        %s472 = smul.addr %s471, 8
        %s473 = scalar_lea.vmem %s5, %s472
        // Predicated region
        $region45: #{net_forward.1} parent=39 // pred_check
          %p474 = pneg %p145
        $region46: #{net_forward.1} parent=39 // pred_check_branch
          %476 = sbr.rel (%p474) target = $region48
        $region47: #{net_forward.1} parent=39 // pred_region
          _
        $region48: #{net_forward.1} parent=39 // pred_fallthru
          _
      $region40: #{net_forward.1} parent=5 // pred_fallthru
        _
      %p477 = scmp.le.s32.totalorder 2, %s12
      // Predicated region
      $region49: #{net_forward.1} parent=5 // pred_check
        %p478 = pneg %p477
      $region50: #{net_forward.1} parent=5 // pred_check_branch
        %480 = sbr.rel (%p478) target = $region52
      $region51: #{net_forward.1} parent=5 // pred_region
        %s481 = ssub.s32 %s12, 2
        // Predicated region
        $region53: #{net_forward.1} parent=51 // pred_check
          %p482 = pneg %p151
        $region54: #{net_forward.1} parent=51 // pred_check_branch
          %484 = sbr.rel (%p482) target = $region56
        $region55: #{net_forward.1} parent=51 // pred_region
          %p485 = scmp.lt.s32.totalorder %s18, 7
          %s486 = scalar_select %p485, %s18, 7
          %s487 = smul.addr %s486, 8
          %s488 = scalar_lea.vmem %s5, %s487
        $region56: #{net_forward.1} parent=51 // pred_fallthru
          _
      $region52: #{net_forward.1} parent=5 // pred_fallthru
        _
    $region6: #{net_forward.1} parent=1 // loop_footer
      %s16 = sadd.s32 1, %s12
    $region7: #{net_forward.1} parent=1 // loop_footer_branch
      %11 = sbr.rel target = $region3
    $region8: #{net_forward.1} parent=1 // loop_exit
      _
    %489 = vsyncpa [#allocation3], 1
    %s490 = scalar_lea.sflag [#allocation3], 1
    %491 = vsyncpa %s490, 1

</llo_original>
